<compile_context>
chip_gen: v5e
topology: v5e:2x2
jax: 0.10.0
libtpu: 0.0.40
codegen_flags: <defaults>
</compile_context>

<pallas_src>
import math

import jax
import jax.numpy as jnp
from jax.experimental import pallas as pl
from jax.experimental.pallas import tpu as pltpu


# ---------------------------------------------------------------------------
# Fused sum + max reduction over the lane (last) axis.
# ---------------------------------------------------------------------------

_WIDE_WSET_BYTES = 48 * 4096      # chunk + 2 wide accumulators <= ~48 vregs
_NARROW_CHUNK_BYTES = 128 * 1024  # live chunk cap for the narrow fallback


def _fused_sum_max(load, n_rows, length):
    """Fused sum and max over the lane axis of an (n_rows, length) slab.

    `load(lane_slice)` returns the corresponding (n_rows, k) float32 block;
    every element is read exactly once.  Only exact logical shapes are loaded,
    so Mosaic's masked reductions handle any ragged trailing lanes.
    Returns (sum, max), each (n_rows, 1) float32.
    """
    if length < 128:                       # tiny spatial axis: one direct reduce
        blk = load(pl.ds(0, length))
        return (jnp.sum(blk, axis=1, keepdims=True),
                jnp.max(blk, axis=1, keepdims=True))

    max_lanes = (length // 128) * 128

    # Wide accumulation keeps (n_rows, chunk) running sum/max on the VPU and
    # does a single XLU lane-reduce at the end; used when it fits in vregs.
    lc_wide = (_WIDE_WSET_BYTES // (3 * 4 * n_rows)) // 128 * 128
    wide = lc_wide >= 128
    if wide:
        chunk = min(lc_wide, max_lanes, 2048)
    else:
        # Narrow fallback (large n_rows): per-chunk XLU reduce, small chunk so
        # the live block stays in-register.
        chunk = max((_NARROW_CHUNK_BYTES // (4 * n_rows)) // 128 * 128, 128)
        chunk = min(chunk, max_lanes)

    n_full = length // chunk
    tail = length - n_full * chunk

    if wide:
        def body(c, carry):
            acc_s, acc_m = carry
            start = pl.multiple_of(c * chunk, 128)
            blk = load(pl.ds(start, chunk))
            return acc_s + blk, jnp.maximum(acc_m, blk)

        init = (jnp.zeros((n_rows, chunk), jnp.float32),
                jnp.full((n_rows, chunk), -jnp.inf, jnp.float32))
        if n_full <= 8:                    # short: fully unrolled, static starts
            acc_s, acc_m = init
            for c in range(n_full):
                blk = load(pl.ds(c * chunk, chunk))
                acc_s = acc_s + blk
                acc_m = jnp.maximum(acc_m, blk)
        else:
            acc_s, acc_m = jax.lax.fori_loop(0, n_full, body, init, unroll=4)
        t_sum = jnp.sum(acc_s, axis=1, keepdims=True)
        t_max = jnp.max(acc_m, axis=1, keepdims=True)
    else:
        def stats(start, size):
            blk = load(pl.ds(start, size))
            return (jnp.sum(blk, axis=1, keepdims=True),
                    jnp.max(blk, axis=1, keepdims=True))

        def body(c, carry):
            acc_s, acc_m = carry
            start = pl.multiple_of(c * chunk, 128)
            s, m = stats(start, chunk)
            return acc_s + s, jnp.maximum(acc_m, m)

        init = (jnp.zeros((n_rows, 1), jnp.float32),
                jnp.full((n_rows, 1), -jnp.inf, jnp.float32))
        if n_full <= 8:
            acc_s, acc_m = init
            for c in range(n_full):
                s, m = stats(c * chunk, chunk)
                acc_s = acc_s + s
                acc_m = jnp.maximum(acc_m, m)
        else:
            acc_s, acc_m = jax.lax.fori_loop(0, n_full, body, init, unroll=4)
        t_sum, t_max = acc_s, acc_m

    if tail > 0:                           # ragged trailing lanes (static shape)
        blk = load(pl.ds(n_full * chunk, tail))
        t_sum = t_sum + jnp.sum(blk, axis=1, keepdims=True)
        t_max = jnp.maximum(t_max, jnp.max(blk, axis=1, keepdims=True))
    return t_sum, t_max


# ---------------------------------------------------------------------------
# Kernel bodies.
# ---------------------------------------------------------------------------

def _make_eca_kernel(C, TC, HW, K, use_halo):
    pad = (K - 1) // 2
    nC = C // TC
    inv_hw = 1.0 / HW

    def conv_gate(w_ref, v_ext):
        # K-tap "same" Conv1d along channels (sublane axis), no bias.
        acc = jnp.zeros((TC, 1), jnp.float32)
        for j in range(K):                 # K is tiny & static -> unrolled
            acc = acc + w_ref[j] * v_ext[j:j + TC, :]
        return jax.nn.sigmoid(acc)         # (TC, 1) float32

    def pool(load, n_rows):
        s, m = _fused_sum_max(load, n_rows, HW)
        return s * inv_hw + m               # avg-pool + max-pool, fused

    if not use_halo:
        def kernel(w_ref, x_ref, o_ref):
            v = pool(lambda ls: x_ref[0, :, ls].astype(jnp.float32), TC)
            if pad > 0:    # zero "same" padding at the channel boundaries
                z = jnp.zeros((pad, 1), jnp.float32)
                v = jnp.concatenate([z, v, z], axis=0)
            gate = conv_gate(w_ref, v)
            # Gating in the native dtype (no f32 shadow copy of the tile).
            # NOTE: for sub-32-bit inputs the gate is rounded to the input
            # dtype before the multiply; bit-exact for the f32 tests here.
            o_ref[0] = x_ref[0] * gate.astype(o_ref.dtype)

        return kernel

    def kernel(w_ref, x_ref, x_hbm_ref, o_ref,
               halo_top, halo_bot, vtop, vbot, sem):
        b = pl.program_id(0)
        ct = pl.program_id(1)
        c0 = ct * TC
        have_top = ct > 0
        have_bot = ct < nC - 1

        def top_copy():
            return pltpu.make_async_copy(
                x_hbm_ref.at[b, pl.ds(c0 - pad, pad)],
                halo_top.at[pl.ds(0, pad)], sem.at[0])

        def bot_copy():
            return pltpu.make_async_copy(
                x_hbm_ref.at[b, pl.ds(c0 + TC, pad)],
                halo_bot.at[pl.ds(0, pad)], sem.at[1])

        # Out-of-range halo channels contribute zero (Conv1d zero padding);
        # boundary tiles skip the halo DMA and halo reduction entirely.
        vtop[...] = jnp.zeros((pad, 1), jnp.float32)
        vbot[...] = jnp.zeros((pad, 1), jnp.float32)

        @pl.when(have_top)
        def _():
            top_copy().start()

        @pl.when(have_bot)
        def _():
            bot_copy().start()

        # Core pooling overlaps the (tiny) halo DMAs.
        v_core = pool(lambda ls: x_ref[0, :, ls].astype(jnp.float32), TC)

        @pl.when(have_top)
        def _():
            top_copy().wait()
            vtop[...] = pool(
                lambda ls: halo_top[pl.ds(0, pad), ls].astype(jnp.float32), pad)

        @pl.when(have_bot)
        def _():
            bot_copy().wait()
            vbot[...] = pool(
                lambda ls: halo_bot[pl.ds(0, pad), ls].astype(jnp.float32), pad)

        v_ext = jnp.concatenate([vtop[...], v_core, vbot[...]], axis=0)
        gate = conv_gate(w_ref, v_ext)
        o_ref[0] = x_ref[0] * gate.astype(o_ref.dtype)

    return kernel


# ---------------------------------------------------------------------------
# Wrapper.
# ---------------------------------------------------------------------------

def _auto_channel_tile(C, HW, itemsize, target):
    """Largest divisor of C that is a multiple of the dtype's sublane packing
    and whose (TC, H*W) tile fits the per-block byte target."""
    sub = max(8, 32 // itemsize)            # 8 f32 / 16 bf16 / 32 int8-fp8
    per_ch = HW * itemsize
    if C * per_ch <= target or C <= sub:
        return C
    divs = [d for d in range(sub, C) if C % d == 0 and d % sub == 0]
    fit = [d for d in divs if d * per_ch <= target]
    if fit:
        return max(fit)
    if divs:                                # nothing fits: smallest aligned divisor
        return min(divs)
    return C                                # no aligned divisor (odd C): whole axis


def eca_block(x, conv_w, *, c_tile=None):
    """ECABlock forward.  x: (B, C, H, W) NCHW; conv_w: (1, 1, K) Conv1d weight."""
    B, C, H, W = x.shape
    HW = H * W
    K = int(conv_w.shape[-1])
    pad = (K - 1) // 2
    itemsize = jnp.dtype(x.dtype).itemsize
    sub = max(8, 32 // itemsize)

    # No host-side lane padding / output slice: the BlockSpec's last dim spans
    # the full H*W axis, so HBM traffic is exactly 1 read + 1 write of x.
    x_flat = x.reshape(B, C, HW)

    # Generation-aware tiling & VMEM budget.
    try:
        vmem_cap = int(pltpu.get_tpu_info().vmem_capacity_bytes)
    except Exception:                              # conservative default (v7x)
        vmem_cap = 64 << 20
    if vmem_cap >= (96 << 20):                     # v5e / v6e (128 MiB physical)
        target = 16 << 20
        limit_cap = vmem_cap - (32 << 20)
    else:                                          # v7x-class (64 MiB physical)
        target = max(vmem_cap // 8, 2 << 20)
        limit_cap = min(48 << 20, vmem_cap - (16 << 20))

    if c_tile is None:
        TC = _auto_channel_tile(C, HW, itemsize, target)
    else:
        TC = int(c_tile)
    assert C % TC == 0 and (TC % sub == 0 or TC == C), "bad channel tile"
    assert TC >= pad, "channel tile smaller than conv halo"
    nC = C // TC
    use_halo = nC > 1 and pad > 0

    w1 = conv_w.reshape(K).astype(jnp.float32)     # conv taps, scalar SMEM reads

    kernel = _make_eca_kernel(C, TC, HW, K, use_halo)

    in_specs = [
        pl.BlockSpec(memory_space=pltpu.SMEM),                 # conv taps
        pl.BlockSpec((1, TC, HW), lambda b, c: (b, c, 0)),     # core tile
    ]
    args = [w1, x_flat]
    scratch_shapes = []
    halo_bytes = 0
    if use_halo:
        in_specs.append(pl.BlockSpec(memory_space=pl.ANY))     # raw x for halo DMA
        args.append(x_flat)
        halo_rows = sub                                        # dtype-packed rows
        scratch_shapes = [pltpu.VMEM((halo_rows, HW), x.dtype),  # top halo rows
                          pltpu.VMEM((halo_rows, HW), x.dtype),  # bottom halo rows
                          pltpu.VMEM((pad, 1), jnp.float32),     # pooled top v
                          pltpu.VMEM((pad, 1), jnp.float32),     # pooled bottom v
                          pltpu.SemaphoreType.DMA((2,))]
        halo_bytes = 2 * halo_rows * HW * itemsize

    # Explicit VMEM budget: double-buffered in+out blocks, the gating
    # temporary, halo buffers and slack, capped below physical VMEM.
    block_bytes = TC * HW * itemsize
    needed = 5 * block_bytes + halo_bytes + (4 << 20)
    vmem_limit = int(min(max(needed, 16 << 20), limit_cap))

    out = pl.pallas_call(
        kernel,
        out_shape=jax.ShapeDtypeStruct((B, C, HW), x.dtype),
        grid=(B, nC),
        in_specs=in_specs,
        out_specs=pl.BlockSpec((1, TC, HW), lambda b, c: (b, c, 0)),
        scratch_shapes=scratch_shapes,
        compiler_params=pltpu.CompilerParams(
            dimension_semantics=("parallel", "parallel"),
            vmem_limit_bytes=vmem_limit),
    )(*args)
    # TODO(synk): for tiny grids (e.g. B=1, nC=1) a third, spatial grid axis
    # would keep both v7x TensorCores busy, but needs a two-pass pooled-v
    # combine; left out for simplicity.
    return out.reshape(B, C, H, W)


# ---------------------------------------------------------------------------
# Pure-JAX reference and tests.
# ---------------------------------------------------------------------------

def eca_reference(x, conv_w):
    """Pure-JAX reference matching the PyTorch forward."""
    B, C, H, W = x.shape
    K = conv_w.shape[-1]
    pad = (K - 1) // 2
    v = jnp.mean(x, axis=(2, 3)) + jnp.max(x, axis=(2, 3))           # (B, C)
    vp = jnp.pad(v, ((0, 0), (pad, pad)))
    conv = sum(conv_w[0, 0, j] * vp[:, j:j + C] for j in range(K))   # (B, C)
    gate = jax.nn.sigmoid(conv)
    return x * gate[:, :, None, None]


def _eca_kernel_size(channels, gamma=2, b=1):
    k = int(abs((math.log(channels, 2) + b) / gamma))
    return k if k % 2 else k + 1


if __name__ == "__main__":
    key = jax.random.PRNGKey(0)

    def check(x, conv_w, **kw):
        out = eca_block(x, conv_w, **kw)
        jax.block_until_ready(out)
        ref = eca_reference(x, conv_w)
        assert out.shape == x.shape
        assert jnp.allclose(out, ref, atol=1e-5, rtol=1e-5), "mismatch vs reference"

    # 1) Small base case (single channel tile, lane-aligned spatial dim).
    B, C, H, W = 2, 8, 16, 16
    K = _eca_kernel_size(C)                                           # -> 3
    k1, k2, key = jax.random.split(key, 3)
    x = jax.random.normal(k1, (B, C, H, W), dtype=jnp.float32)
    w = 0.5 * jax.random.normal(k2, (1, 1, K), dtype=jnp.float32)
    check(x, w)

    # 2) Channel-tiled path (grid over C with coalesced conv-halo DMAs).
    C2 = 16
    K2 = _eca_kernel_size(C2)                                         # -> 3
    k1, k2, key = jax.random.split(key, 3)
    x2 = jax.random.normal(k1, (B, C2, H, W), dtype=jnp.float32)
    w2 = 0.5 * jax.random.normal(k2, (1, 1, K2), dtype=jnp.float32)
    check(x2, w2, c_tile=8)

    # 3) Non-multiple-of-128 spatial dim (no host pad, ragged lanes);
    #    all-negative inputs so an incorrectly padded max would fail.
    H3 = W3 = 10
    k1, k2, key = jax.random.split(key, 3)
    x3 = jax.random.normal(k1, (B, C, H3, W3), dtype=jnp.float32) - 5.0
    w3 = 0.5 * jax.random.normal(k2, (1, 1, K), dtype=jnp.float32)
    check(x3, w3)

    print("KERNEL_OK")
</pallas_src>

<mosaic_0001>
module attributes {stable_mosaic.version = 11 : i64} {
  func.func @kernel(%arg0: i32, %arg1: i32, %arg2: memref<3xf32, #tpu.memory_space<smem>>, %arg3: memref<1x8x256xf32, #tpu.memory_space<vmem>>, %arg4: memref<1x8x256xf32, #tpu.memory_space<vmem>>) attributes {dimension_semantics = [#tpu.dimension_semantics<parallel>, #tpu.dimension_semantics<parallel>], iteration_bounds = array<i64: 2, 1>, scalar_prefetch = 0 : i64, scratch_operands = 0 : i64, tpu.core_type = #tpu.core_type<tc>, window_params = [{transform_indices = @transform_0, window_bounds = array<i64: 3>}, {transform_indices = @transform_1, window_bounds = array<i64: 1, 8, 256>}, {transform_indices = @transform_2, window_bounds = array<i64: 1, 8, 256>}]} {
    %cst = arith.constant 0.000000e+00 : f32
    %0 = vector.broadcast %cst : f32 to vector<8x256xf32>
    %cst_0 = arith.constant 0xFF800000 : f32
    %1 = vector.broadcast %cst_0 : f32 to vector<8x256xf32>
    %c0 = arith.constant 0 : index
    %c0_1 = arith.constant 0 : index
    %c0_2 = arith.constant 0 : index
    %2 = vector.load %arg3[%c0, %c0_1, %c0_2] : memref<1x8x256xf32, #tpu.memory_space<vmem>>, vector<1x8x256xf32>
    %3 = vector.shape_cast %2 : vector<1x8x256xf32> to vector<8x256xf32>
    %4 = arith.addf %0, %3 : vector<8x256xf32>
    %5 = arith.maximumf %1, %3 : vector<8x256xf32>
    %cst_3 = arith.constant dense<0.000000e+00> : vector<8xf32>
    %6 = vector.multi_reduction <add>, %4, %cst_3 [1] : vector<8x256xf32> to vector<8xf32>
    %7 = vector.shape_cast %6 : vector<8xf32> to vector<8x1xf32>
    %cst_4 = arith.constant dense<0xFF800000> : vector<8xf32>
    %8 = vector.multi_reduction <maximumf>, %5, %cst_4 [1] : vector<8x256xf32> to vector<8xf32>
    %9 = vector.shape_cast %8 : vector<8xf32> to vector<8x1xf32>
    %cst_5 = arith.constant 3.906250e-03 : f32
    %10 = vector.broadcast %cst_5 : f32 to vector<8x1xf32>
    %11 = arith.mulf %7, %10 : vector<8x1xf32>
    %12 = arith.addf %11, %9 : vector<8x1xf32>
    %cst_6 = arith.constant 0.000000e+00 : f32
    %13 = vector.broadcast %cst_6 : f32 to vector<1x1xf32>
    %14 = tpu.concatenate %13, %12, %13 in 0 : vector<1x1xf32>, vector<8x1xf32>, vector<1x1xf32> -> vector<10x1xf32>
    %cst_7 = arith.constant 0.000000e+00 : f32
    %15 = vector.broadcast %cst_7 : f32 to vector<8x1xf32>
    %c0_8 = arith.constant 0 : index
    %16 = memref.load %arg2[%c0_8] : memref<3xf32, #tpu.memory_space<smem>>
    %17 = vector.extract_strided_slice %14 {offsets = [0, 0], sizes = [8, 1], strides = [1, 1]} : vector<10x1xf32> to vector<8x1xf32>
    %18 = vector.broadcast %16 : f32 to vector<8x1xf32>
    %19 = arith.mulf %18, %17 : vector<8x1xf32>
    %20 = arith.addf %15, %19 : vector<8x1xf32>
    %c1 = arith.constant 1 : index
    %21 = memref.load %arg2[%c1] : memref<3xf32, #tpu.memory_space<smem>>
    %22 = vector.extract_strided_slice %14 {offsets = [1, 0], sizes = [8, 1], strides = [1, 1]} : vector<10x1xf32> to vector<8x1xf32>
    %23 = vector.broadcast %21 : f32 to vector<8x1xf32>
    %24 = arith.mulf %23, %22 : vector<8x1xf32>
    %25 = arith.addf %20, %24 : vector<8x1xf32>
    %c2 = arith.constant 2 : index
    %26 = memref.load %arg2[%c2] : memref<3xf32, #tpu.memory_space<smem>>
    %27 = vector.extract_strided_slice %14 {offsets = [2, 0], sizes = [8, 1], strides = [1, 1]} : vector<10x1xf32> to vector<8x1xf32>
    %28 = vector.broadcast %26 : f32 to vector<8x1xf32>
    %29 = arith.mulf %28, %27 : vector<8x1xf32>
    %30 = arith.addf %25, %29 : vector<8x1xf32>
    %31 = arith.negf %30 : vector<8x1xf32>
    %32 = math.exp %31 : vector<8x1xf32>
    %cst_9 = arith.constant 1.000000e+00 : f32
    %33 = vector.broadcast %cst_9 : f32 to vector<8x1xf32>
    %34 = arith.addf %33, %32 : vector<8x1xf32>
    %35 = arith.divf %33, %34 : vector<8x1xf32>
    %c0_10 = arith.constant 0 : index
    %c0_11 = arith.constant 0 : index
    %c0_12 = arith.constant 0 : index
    %36 = vector.load %arg3[%c0_10, %c0_11, %c0_12] : memref<1x8x256xf32, #tpu.memory_space<vmem>>, vector<1x8x256xf32>
    %37 = vector.shape_cast %36 : vector<1x8x256xf32> to vector<8x256xf32>
    %38 = vector.broadcast %35 : vector<8x1xf32> to vector<8x256xf32>
    %39 = arith.mulf %37, %38 : vector<8x256xf32>
    %c0_13 = arith.constant 0 : index
    %c0_14 = arith.constant 0 : index
    %c0_15 = arith.constant 0 : index
    %40 = vector.load %arg4[%c0_13, %c0_14, %c0_15] : memref<1x8x256xf32, #tpu.memory_space<vmem>>, vector<1x8x256xf32>
    %41 = vector.shape_cast %40 : vector<1x8x256xf32> to vector<8x256xf32>
    %42 = vector.shape_cast %39 : vector<8x256xf32> to vector<1x8x256xf32>
    tpu.vector_store %arg4[%c0_13, %c0_14, %c0_15], %42 {strides = array<i32>} : memref<1x8x256xf32, #tpu.memory_space<vmem>>, vector<1x8x256xf32>,
    return
  }
  func.func @transform_0(%arg0: i32, %arg1: i32) -> i32 {
    %c0_i32 = arith.constant 0 : i32
    %c0_i32_0 = arith.constant 0 : i32
    return %c0_i32 : i32
  }
  func.func @transform_1(%arg0: i32, %arg1: i32) -> (i32, i32, i32) {
    %c0_i32 = arith.constant 0 : i32
    %c0_i32_0 = arith.constant 0 : i32
    return %arg0, %arg1, %c0_i32 : i32, i32, i32
  }
  func.func @transform_2(%arg0: i32, %arg1: i32) -> (i32, i32, i32) {
    %c0_i32 = arith.constant 0 : i32
    %c0_i32_0 = arith.constant 0 : i32
    return %arg0, %arg1, %c0_i32 : i32, i32, i32
  }
}

</mosaic_0001>

<llo_original>
// kernel: tpu_custom_call.1
$region0: #{tpu_custom_call.1}
  #allocation0 [shape = 'u32[]', space=smem, size = 0x4, offset = 0x4, fixed_abs, tag = 'smem constant byte address 0x4 - core index']
  #allocation1 [shape = 'u32[72,128]{1,0:T(1,128)}', space=vmem, size = 0x9000, scoped, tag = 'internal scratch']
  %s0 = inlined_call_operand.hbm [shape: f32[3], index: 0, kind: input, shape index: {}]
  %s1 = inlined_call_operand.hbm [shape: f32[2,8,256], index: 1, kind: input, shape index: {}]
  %s2 = inlined_call_operand.hbm [shape: f32[2,8,256], index: 2, kind: output, shape index: {}]
  %s3 = sld [smem:[#allocation0]]
  $region49: #{tpu_custom_call.1} parent=0
    _
  %s5 = ssub.s32 1, %s3
  %s6 = scalar_select 0, %s5, %s3
  $region1: #{tpu_custom_call.1} parent=0
    #allocation2 [shape = 'u8[512]{0}', space=smem, size = 0x200, scoped, tag = 'input window, operand 0, single buffered']
    #allocation3 [shape = 's32[2]{0}', space=sflag, size = 0x8, scoped, tag = 'scoped memory for tpu_custom_call.1']
    #allocation4 [shape = 's32[2]{0}', space=sflag, size = 0x8, scoped, tag = 'scoped memory for tpu_custom_call.1']
    #allocation5 [shape = 's32[2]{0}', space=sflag, size = 0x8, scoped, tag = 'scoped memory for tpu_custom_call.1']
    #allocation6 [shape = 'u8[16384]{0}', space=vmem, size = 0x4000, scoped, tag = 'input window, operand 1']
    #allocation7 [shape = 'u8[16384]{0}', space=vmem, size = 0x4000, scoped, tag = 'output window, operand 0']
    %7 = vsyncpa [#allocation5], 0
    %8 = vsyncpa [#allocation3], 0
    %s9 = scalar_lea.sflag [#allocation3], 1
    %10 = vsyncpa %s9, 0
    %11 = vsyncpa [#allocation4], 0
    %s12 = scalar_lea.sflag [#allocation4], 1
    %13 = vsyncpa %s12, 0
    loop: start=0, step=1, limit=4
    $region2: #{tpu_custom_call.1} parent=1 // loop_pre_header
      _
    $region3: #{tpu_custom_call.1} parent=1 // loop_header
      %s15 = sphi 0, %s19
      %p16 = scmp.ge.s32.totalorder %s15, 4
      %s22 = sphi 0, %s34
      %s23 = sphi 0, %s30
      %s24 = sphi 0, %s22
      %s25 = sphi 0, %s23
      %s26 = sphi 0, %s24
      %s27 = sphi 0, %s25
      %s35 = sphi 0, %s35
      %s37 = sphi 0, %s35
      %s38 = sphi 0, %s37
      %s52 = sphi 0, %s38
      %s60 = sphi 0, %s62
      %s63 = sphi 0, %s60
      %s64 = sphi 0, %s63
      %s80 = sphi 0, %s64
      %s88 = sphi 0, %s90
      %s91 = sphi 0, %s88
      %s92 = sphi 0, %s91
      %s108 = sphi 0, %s92
    $region4: #{tpu_custom_call.1} parent=1 // loop_header_branch
      %18 = sbr.rel (%p16) target = $region8
    $region5: #{tpu_custom_call.1} parent=1 // loop_body
      %s20 = ssub.s32 %s15, 1
      %s21 = ssub.s32 %s15, 2
      %s28 = sadd.s32 1, %s23
      %p29 = scmp.ge.s32.totalorder %s28, 1
      %s30 = scalar_select %p29, 0, %s28
      %s31 = sadd.s32 1, %s22
      %s32 = scalar_select %p29, %s31, %s22
      %p33 = scmp.ge.s32.totalorder %s32, 2
      %s34 = scalar_select %p33, 0, %s32
      %s36 = sadd.s32 %s35, 1
      %p39 = scmp.eq.s32.totalorder %s15, 1
      %p40 = scmp.ne.s32.totalorder %s35, %s37
      %p41 = scmp.eq.s32.totalorder %s15, 0
      %p42 = por %p40, %p41
      %p43 = scmp.ne.s32.totalorder %s35, %s37
      %p44 = scmp.eq.s32.totalorder %s20, 1
      %p45 = por %p43, %p44
      %p46 = scmp.ne.s32.totalorder %s37, %s38
      %p47 = scmp.eq.s32.totalorder %s20, 0
      %p48 = por %p46, %p47
      %p49 = scmp.ne.s32.totalorder %s37, %s38
      %p50 = scmp.eq.s32.totalorder %s21, 1
      %p51 = por %p49, %p50
      %p53 = scmp.ne.s32.totalorder %s38, %s52
      %p54 = scmp.eq.s32.totalorder %s21, 0
      %p55 = por %p53, %p54
      %s56 = ssub.s32 %s22, %s34
      %s57 = ssub.s32 %s23, %s30
      %s58 = sor.u32 %s56, %s57
      %p59 = scmp.eq.s32.totalorder %s58, 0
      %s61 = sadd.s32 %s60, 1
      %s62 = scalar_select %p59, %s60, %s61
      %p65 = pneg %p59
      %p66 = scmp.eq.s32.totalorder %s15, 1
      %p67 = por %p65, %p66
      %p68 = scmp.ne.s32.totalorder %s60, %s63
      %p69 = scmp.eq.s32.totalorder %s15, 0
      %p70 = por %p68, %p69
      %p71 = scmp.ne.s32.totalorder %s60, %s63
      %p72 = scmp.eq.s32.totalorder %s20, 1
      %p73 = por %p71, %p72
      %p74 = scmp.ne.s32.totalorder %s63, %s64
      %p75 = scmp.eq.s32.totalorder %s20, 0
      %p76 = por %p74, %p75
      %p77 = scmp.ne.s32.totalorder %s63, %s64
      %p78 = scmp.eq.s32.totalorder %s21, 1
      %p79 = por %p77, %p78
      %p81 = scmp.ne.s32.totalorder %s64, %s80
      %p82 = scmp.eq.s32.totalorder %s21, 0
      %p83 = por %p81, %p82
      %s84 = ssub.s32 %s22, %s34
      %s85 = ssub.s32 %s23, %s30
      %s86 = sor.u32 %s84, %s85
      %p87 = scmp.eq.s32.totalorder %s86, 0
      %s89 = sadd.s32 %s88, 1
      %s90 = scalar_select %p87, %s88, %s89
      %p93 = pneg %p87
      %p94 = scmp.eq.s32.totalorder %s15, 1
      %p95 = por %p93, %p94
      %p96 = scmp.ne.s32.totalorder %s88, %s91
      %p97 = scmp.eq.s32.totalorder %s15, 0
      %p98 = por %p96, %p97
      %p99 = scmp.ne.s32.totalorder %s88, %s91
      %p100 = scmp.eq.s32.totalorder %s20, 1
      %p101 = por %p99, %p100
      %p102 = scmp.ne.s32.totalorder %s91, %s92
      %p103 = scmp.eq.s32.totalorder %s20, 0
      %p104 = por %p102, %p103
      %p105 = scmp.ne.s32.totalorder %s91, %s92
      %p106 = scmp.eq.s32.totalorder %s21, 1
      %p107 = por %p105, %p106
      %p109 = scmp.ne.s32.totalorder %s92, %s108
      %p110 = scmp.eq.s32.totalorder %s21, 0
      %p111 = por %p109, %p110
      %p112 = scmp.le.s32.totalorder 1, %s15
      %p113 = scmp.lt.s32.totalorder %s15, 3
      %p114 = pnand %p112, %p113
      %p115 = pneg %p114
      // Predicated region
      $region9: #{tpu_custom_call.1} parent=5 // pred_check
        _
      $region10: #{tpu_custom_call.1} parent=5 // pred_check_branch
        %117 = sbr.rel (%p114) target = $region12
      $region11: #{tpu_custom_call.1} parent=5 // pred_region
        %s118 = ssub.s32 %s15, 1
        // Predicated region
        $region13: #{tpu_custom_call.1} parent=11 // pred_check
          %p119 = pneg %p48
        $region14: #{tpu_custom_call.1} parent=11 // pred_check_branch
          %121 = sbr.rel (%p119) target = $region16
        $region15: #{tpu_custom_call.1} parent=11 // pred_region
          %123 = vsyncadd [#allocation5], 0
          %s125 = sshll.u32 %s0, 4
          %s126 = int_to_ptr.hbm [resolvable:$true] %s125
          %128 = dma.hbm_to_smem %s126, 16, [#allocation2], [#allocation5]
        $region16: #{tpu_custom_call.1} parent=11 // pred_fallthru
          _
      $region12: #{tpu_custom_call.1} parent=5 // pred_fallthru
        _
      %p129 = scmp.lt.s32.totalorder %s15, 2
      // Predicated region
      $region17: #{tpu_custom_call.1} parent=5 // pred_check
        %p130 = pneg %p129
      $region18: #{tpu_custom_call.1} parent=5 // pred_check_branch
        %132 = sbr.rel (%p130) target = $region20
      $region19: #{tpu_custom_call.1} parent=5 // pred_region
        // Predicated region
        $region21: #{tpu_custom_call.1} parent=19 // pred_check
          %p133 = pneg %p70
        $region22: #{tpu_custom_call.1} parent=19 // pred_check_branch
          %135 = sbr.rel (%p133) target = $region24
        $region23: #{tpu_custom_call.1} parent=19 // pred_region
          %s136 = sand.u32 %s60, 1
          %s137 = scalar_lea.sflag [#allocation3], %s136
          %s138 = sand.u32 %s60, 1
          %s139 = smul.addr %s138, 16
          %s140 = scalar_lea.vmem [#allocation6], %s139
          %142 = vsyncadd %s137, 0
          %s143 = smul.addr %s23, 2
          %s144 = smul.addr %s22, 2
          %s145 = sadd.s32 %s143, %s144
          %s146 = smul.addr %s145, 8
          %s147 = scalar_lea.hbm %s1, %s146
          %s149 = sshll.u32 %s147, 4
          %s150 = int_to_ptr.hbm [resolvable:$true] %s149
          %s151 = sshll.u32 %s140, 4
          %s152 = int_to_ptr.vmem [resolvable:$true] %s151
          %154 = dma.hbm_to_vmem [thread:$0]  %s150, 256, %s152, %s137
        $region24: #{tpu_custom_call.1} parent=19 // pred_fallthru
          _
      $region20: #{tpu_custom_call.1} parent=5 // pred_fallthru
        _
      %p155 = scmp.le.s32.totalorder 1, %s15
      %p156 = scmp.lt.s32.totalorder %s15, 3
      %p157 = pnand %p155, %p156
      %p158 = pneg %p157
      // Predicated region
      $region25: #{tpu_custom_call.1} parent=5 // pred_check
        _
      $region26: #{tpu_custom_call.1} parent=5 // pred_check_branch
        %160 = sbr.rel (%p157) target = $region28
      $region27: #{tpu_custom_call.1} parent=5 // pred_region
        %s161 = ssub.s32 %s15, 1
        // Predicated region
        $region29: #{tpu_custom_call.1} parent=27 // pred_check
          %p162 = pneg %p48
        $region30: #{tpu_custom_call.1} parent=27 // pred_check_branch
          %164 = sbr.rel (%p162) target = $region32
        $region31: #{tpu_custom_call.1} parent=27 // pred_region
          %166 = dma.done [#allocation5], 16
        $region32: #{tpu_custom_call.1} parent=27 // pred_fallthru
          _
        %s167 = sand.u32 %s63, 1
        %s168 = scalar_lea.sflag [#allocation3], %s167
        %s169 = sand.u32 %s63, 1
        %s170 = smul.addr %s169, 16
        %s171 = scalar_lea.vmem [#allocation6], %s170
        // Predicated region
        $region33: #{tpu_custom_call.1} parent=27 // pred_check
          %p172 = pneg %p76
        $region34: #{tpu_custom_call.1} parent=27 // pred_check_branch
          %174 = sbr.rel (%p172) target = $region36
        $region35: #{tpu_custom_call.1} parent=27 // pred_region
          %176 = dma.done %s168, 256
        $region36: #{tpu_custom_call.1} parent=27 // pred_fallthru
          _
        %177 = sfence
        %p178 = pneg %p48
        %p179 = pneg %p45
        %s180 = sand.u32 %s63, 1
        %s181 = scalar_lea.sflag [#allocation3], %s180
        %s182 = sand.u32 %s63, 1
        %s183 = smul.addr %s182, 16
        %s184 = scalar_lea.vmem [#allocation6], %s183
        %p185 = pneg %p76
        %p186 = pneg %p73
        %p187 = pneg %p104
        %p188 = pneg %p101
        %s189 = sand.u32 %s91, 1
        %s190 = scalar_lea.sflag [#allocation4], %s189
        %s191 = sand.u32 %s91, 1
        %s192 = smul.addr %s191, 16
        %s193 = scalar_lea.vmem [#allocation7], %s192
        %v194 = vld [vmem:[%s171] sm:$0xff]
        %v195 = vld [vmem:[%s171 + $0x8] sm:$0xff]
        %v196 = vadd.f32 %v194, 0.0
        %v197 = vadd.f32 %v195, 0.0
        %v198 = vadd.f32 %v196, %v197
        %199 = vadd.xlane.f32.xlu0 %v198
        %v200 = vpop.xlane.xlu0 %199
        %v201 = vmax.f32 %v194, %v195
        %202 = vmax.xlane.f32.xlu0 %v201
        %v203 = vpop.xlane.xlu0 %202
        %v204 = vmul.f32 %v200, 0.00390625
        %v205 = vadd.f32 %v204, %v203
        %v207 = vrot.slane %v205, 7
        %vm209 = vcmask 1040384
        %v210 = vsel %vm209, 0.0, %v207
        %v211 = vsel %vm209, %v207, 0.0
        %s212 = sld [smem:[#allocation2]]
        %v213 = vstv %s212
        %v214 = vmul.f32 %v213, %v210
        %v215 = vadd.f32 %v214, 0.0
        %s216 = sld [smem:[#allocation2 + $0x1]]
        %v217 = vstv %s216
        %v218 = vmul.f32 %v217, %v210
        %v219 = vmul.f32 %v217, %v211
        %vm222 = vcmask 1046528
        %v223 = vrot.slane %v218, 1
        %v224 = vrot.slane %v219, 1
        %v225 = vsel %vm222, %v223, %v224
        %v227 = vadd.f32 %v215, %v225
        %s228 = sld [smem:[#allocation2 + $0x2]]
        %v229 = vstv %s228
        %v230 = vmul.f32 %v229, %v210
        %v231 = vmul.f32 %v229, %v211
        %vm234 = vcmask 1045504
        %v235 = vrot.slane %v230, 2
        %v236 = vrot.slane %v231, 2
        %v237 = vsel %vm234, %v235, %v236
        %v239 = vadd.f32 %v227, %v237
        %v240 = vxor.u32 %v239, 2147483648
        %v241 = vmul.f32 %v240, 1.442695
        %v242 = vpow.pop %v241
        %v243 = vadd.f32 %v242, 1.0
        %v244 = vrcp.pop %v243
        %v245 = vmul.f32 %v243, %v244
        %v246 = vsub.f32 1.0, %v245
        %v247 = vmul.f32 %v244, %v246
        %v248 = vadd.f32 %v244, %v247
        %vm249 = vweird.f32 %v243
        %vm250 = vweird.f32 %v244
        %vm251 = vmor %vm249, %vm250
        %v252 = vsel %vm251, %v244, %v248
        %v253 = vand.u32 2147483647, %v243
        %vm254 = vcmp.eq.f32.partialorder %v253, 8.507059e+37
        %v255 = vand.u32 %v243, 2147483648
        %v256 = vor.u32 1.1754944e-38, %v255
        %v257 = vsel %vm254, %v256, %v252
        %v258 = vmul.f32 1.0, %v257
        %260 = vset.pattern.permute.xlu0 0
        %261 = vperm.xlu0 %260, %v258
        %v262 = vpop.permute.xlu0 %261
        %v264 = vmul.f32 %v194, %v262
        %v265 = vmul.f32 %v195, %v262
        %266 = vst [vmem:[%s193] sm:$0xff] %v264
        %267 = vst [vmem:[%s193 + $0x8] sm:$0xff] %v265
        %s268 = sand.u32 %s91, 1
        %s269 = scalar_lea.sflag [#allocation4], %s268
        %s270 = sand.u32 %s91, 1
        %s271 = smul.addr %s270, 16
        %s272 = scalar_lea.vmem [#allocation7], %s271
        // Predicated region
        $region37: #{tpu_custom_call.1} parent=27 // pred_check
          %p273 = pneg %p101
        $region38: #{tpu_custom_call.1} parent=27 // pred_check_branch
          %275 = sbr.rel (%p273) target = $region40
        $region39: #{tpu_custom_call.1} parent=27 // pred_region
          %277 = vsyncadd %s269, 0
          %s278 = smul.addr %s25, 2
          %s279 = smul.addr %s24, 2
          %s280 = sadd.s32 %s278, %s279
          %s281 = smul.addr %s280, 8
          %s282 = scalar_lea.hbm %s2, %s281
          %s284 = sshll.u32 %s272, 4
          %s285 = int_to_ptr.vmem [resolvable:$true] %s284
          %s286 = sshll.u32 %s282, 4
          %s287 = int_to_ptr.hbm [resolvable:$true] %s286
          %289 = dma.vmem_to_hbm [thread:$0]  %s285, 256, %s287, %s269
        $region40: #{tpu_custom_call.1} parent=27 // pred_fallthru
          _
      $region28: #{tpu_custom_call.1} parent=5 // pred_fallthru
        _
      %p290 = scmp.le.s32.totalorder 2, %s15
      // Predicated region
      $region41: #{tpu_custom_call.1} parent=5 // pred_check
        %p291 = pneg %p290
      $region42: #{tpu_custom_call.1} parent=5 // pred_check_branch
        %293 = sbr.rel (%p291) target = $region44
      $region43: #{tpu_custom_call.1} parent=5 // pred_region
        %s294 = ssub.s32 %s15, 2
        // Predicated region
        $region45: #{tpu_custom_call.1} parent=43 // pred_check
          %p295 = pneg %p107
        $region46: #{tpu_custom_call.1} parent=43 // pred_check_branch
          %297 = sbr.rel (%p295) target = $region48
        $region47: #{tpu_custom_call.1} parent=43 // pred_region
          %s298 = sand.u32 %s92, 1
          %s299 = scalar_lea.sflag [#allocation4], %s298
          %s300 = sand.u32 %s92, 1
          %s301 = smul.addr %s300, 16
          %s302 = scalar_lea.vmem [#allocation7], %s301
          %304 = dma.done %s299, 256
        $region48: #{tpu_custom_call.1} parent=43 // pred_fallthru
          _
      $region44: #{tpu_custom_call.1} parent=5 // pred_fallthru
        _
    $region6: #{tpu_custom_call.1} parent=1 // loop_footer
      %s19 = sadd.s32 1, %s15
    $region7: #{tpu_custom_call.1} parent=1 // loop_footer_branch
      %14 = sbr.rel target = $region3
    $region8: #{tpu_custom_call.1} parent=1 // loop_exit
      _
    %305 = vsyncpa [#allocation3], 1
    %s306 = scalar_lea.sflag [#allocation3], 1
    %307 = vsyncpa %s306, 1
    %308 = vsyncpa [#allocation4], 1
    %s309 = scalar_lea.sflag [#allocation4], 1
    %310 = vsyncpa %s309, 1
    %311 = vsyncpa [#allocation5], 1
    %s312 = scalar_lea.sflag [#allocation5], 1
    %313 = vsyncpa %s312, 1

</llo_original>
